<compile_context>
chip_gen: v5e
topology: v5e:2x2
jax: 0.10.0
libtpu: 0.0.40
codegen_flags: <defaults>
</compile_context>

<pallas_src>
import functools

import jax
import jax.numpy as jnp
from jax.experimental import pallas as pl
from jax.experimental.pallas import tpu as pltpu


def _round_up(n: int, m: int) -> int:
    return ((n + m - 1) // m) * m


def _block_bytes(shape, itemsize) -> int:
    """Lane/sublane padded size of one pipeline buffer for `shape`."""
    if len(shape) == 1:
        return _round_up(shape[0], 128) * itemsize
    lead = 1
    for d in shape[:-2]:
        lead *= int(d)
    return lead * _round_up(shape[-2], 8) * _round_up(shape[-1], 128) * itemsize


# --------------------------------------------------------------------------- kernels
def _mlp_packed_kernel(x_ref, w1_ref, b1_ref, w2_ref, b2_ref, w3_ref, b3_ref, o_ref):
    """Lane-packed tile: x_ref is (tile_p, pack*obs)=128 lanes (dense), weights are
    block-diagonal.  All three layers are MXU matmuls with f32 accumulation; the
    final layer uses the (pack*hid, pack) block-diagonal w3 so no sublane<->lane
    relayout is needed inside the kernel."""
    h1 = jnp.dot(x_ref[...], w1_ref[...], preferred_element_type=jnp.float32) + b1_ref[...]
    h1 = jnp.maximum(h1, 0.0)
    h2 = jnp.dot(h1, w2_ref[...], preferred_element_type=jnp.float32) + b2_ref[...]
    h2 = jnp.maximum(h2, 0.0)
    out = jnp.dot(h2, w3_ref[...], preferred_element_type=jnp.float32) + b3_ref[0]
    o_ref[...] = out.astype(o_ref.dtype)                     # (tile_p, pack)


def _mlp_reduce_kernel(x_ref, w1_ref, b1_ref, w2_ref, b2_ref, w3_ref, b3_ref, o_ref):
    """Fallback (un-packed) tile: x_ref is (tile_b, obs_dims).  Layers 1/2 on the
    MXU (f32 accumulation); layer 3 is a VPU multiply + lane reduction producing a
    lane-dense 1-D (tile_b,) output (unmasked 128-lane stores)."""
    h1 = jnp.dot(x_ref[...], w1_ref[...], preferred_element_type=jnp.float32) + b1_ref[...]
    h1 = jnp.maximum(h1, 0.0)
    h2 = jnp.dot(h1, w2_ref[...], preferred_element_type=jnp.float32) + b2_ref[...]
    h2 = jnp.maximum(h2, 0.0)
    out = jnp.sum(h2 * w3_ref[...], axis=-1) + b3_ref[0]     # (tile_b,)
    o_ref[...] = out.astype(o_ref.dtype)


# --------------------------------------------------------------------------- wrapper
@functools.partial(jax.jit, static_argnames=("tile_b", "use_bf16_inputs"))
def value_network_forward(x, params, *, tile_b: int = 4096, use_bf16_inputs: bool = False):
    """Value network forward pass via a fused Pallas TPU kernel.

    x: (B, obs_dims); params: w1 (obs,hid), b1 (1,hid), w2 (hid,hid), b2 (1,hid),
    w3 (hid,1), b3 (1,).  Returns (B, 1) float32.

    tile_b: logical batch rows per grid step (multiple of 128; review-recommended
    2048-4096 default).  use_bf16_inputs: stream x (and w1) as bf16 into the MXU
    (halves the dominant HBM read; f32 accumulation and f32 post-matmul math kept).
    """
    B, obs_dims = x.shape
    hid = params["w1"].shape[1]

    x_dtype = jnp.bfloat16 if use_bf16_inputs else jnp.float32
    x = x.astype(x_dtype)                                     # mirrors x.float() / bf16 stream

    # Lane-dense packing decision (static: depends only on shapes).
    pack = 128 // obs_dims if (obs_dims <= 128 and 128 % obs_dims == 0) else 1
    use_packed = pack > 1 and pack * hid <= 1024              # keep block-diag w2 small

    # Batch tile: multiple of 128 (lane-dense / sublane-aligned blocks); clamped so
    # tiny batches don't over-allocate and so the grid has >= 2 steps whenever
    # B > 128 (lets "parallel" semantics shard steps across v7x's 2 TensorCores).
    tile_b = max(128, min(int(tile_b), max(128, _round_up(B, 256) // 2)))
    tile_b = _round_up(tile_b, max(128, 8 * pack) if use_packed else 128)
    B_pad = _round_up(B, tile_b)
    grid = (B_pad // tile_b,)

    if B_pad != B:                                            # padded rows discarded below
        x = jnp.pad(x, ((0, B_pad - B), (0, 0)))

    # Weights: cast w1 to the x dtype so the MXU sees matching operands directly
    # (no whole-tile astype inside the kernel); everything downstream stays f32.
    w1 = params["w1"].astype(x_dtype)
    b1 = params["b1"].astype(jnp.float32)
    w2 = params["w2"].astype(jnp.float32)
    b2 = params["b2"].astype(jnp.float32)
    w3 = params["w3"].astype(jnp.float32)
    b3 = params["b3"].reshape(1).astype(jnp.float32)          # scalar bias -> SMEM

    if use_packed:
        # Pack `pack` logical rows per 128-lane physical row; block-diagonal weights
        # make the layers act independently on each packed slot.  (Layer-2 MXU flops
        # grow by `pack`x, which is irrelevant here: the kernel is HBM-bound.)
        tile_p = tile_b // pack
        eye_x = jnp.eye(pack, dtype=x_dtype)
        eye_f = jnp.eye(pack, dtype=jnp.float32)
        w1_k = jnp.kron(eye_x, w1)                            # (pack*obs, pack*hid)
        w2_k = jnp.kron(eye_f, w2)                            # (pack*hid, pack*hid)
        w3_k = jnp.kron(eye_f, w3)                            # (pack*hid, pack)
        b1_k = jnp.tile(b1, (1, pack))                        # (1, pack*hid)
        b2_k = jnp.tile(b2, (1, pack))
        x_p = x.reshape(B_pad // pack, pack * obs_dims)       # lane-dense (.., 128)

        kernel = _mlp_packed_kernel
        operands = (x_p, w1_k, b1_k, w2_k, b2_k, w3_k, b3)
        in_specs = [
            pl.BlockSpec((tile_p, pack * obs_dims), lambda i: (i, 0)),   # x: streamed
            pl.BlockSpec((pack * obs_dims, pack * hid), lambda i: (0, 0)),
            pl.BlockSpec((1, pack * hid), lambda i: (0, 0)),
            pl.BlockSpec((pack * hid, pack * hid), lambda i: (0, 0)),
            pl.BlockSpec((1, pack * hid), lambda i: (0, 0)),
            pl.BlockSpec((pack * hid, pack), lambda i: (0, 0)),
            pl.BlockSpec(memory_space=pltpu.MemorySpace.SMEM),           # b3 scalar
        ]
        out_specs = pl.BlockSpec((tile_p, pack), lambda i: (i, 0))
        out_shape = jax.ShapeDtypeStruct((B_pad // pack, pack), jnp.float32)

        pipeline_blocks = [
            ((tile_p, pack * obs_dims), x_p.dtype.itemsize),
            ((pack * obs_dims, pack * hid), w1_k.dtype.itemsize),
            ((1, pack * hid), 4),
            ((pack * hid, pack * hid), 4),
            ((1, pack * hid), 4),
            ((pack * hid, pack), 4),
            ((tile_p, pack), 4),
        ]
        act_bytes = 3 * tile_p * _round_up(pack * hid, 128) * 4 + tile_p * 128 * 4
    else:
        # Fallback for obs_dims that don't divide 128: previous (validated) layout
        # with a VPU multiply + lane reduction for layer 3 and a lane-dense 1-D out.
        w3_row = w3.reshape(1, hid)
        kernel = _mlp_reduce_kernel
        operands = (x, w1, b1, w2, b2, w3_row, b3)
        in_specs = [
            pl.BlockSpec((tile_b, obs_dims), lambda i: (i, 0)),          # x: streamed
            pl.BlockSpec((obs_dims, hid), lambda i: (0, 0)),
            pl.BlockSpec((1, hid), lambda i: (0, 0)),
            pl.BlockSpec((hid, hid), lambda i: (0, 0)),
            pl.BlockSpec((1, hid), lambda i: (0, 0)),
            pl.BlockSpec((1, hid), lambda i: (0, 0)),
            pl.BlockSpec(memory_space=pltpu.MemorySpace.SMEM),           # b3 scalar
        ]
        out_specs = pl.BlockSpec((tile_b,), lambda i: (i,))
        out_shape = jax.ShapeDtypeStruct((B_pad,), jnp.float32)

        pipeline_blocks = [
            ((tile_b, obs_dims), x.dtype.itemsize),
            ((obs_dims, hid), w1.dtype.itemsize),
            ((1, hid), 4),
            ((hid, hid), 4),
            ((1, hid), 4),
            ((1, hid), 4),
            ((tile_b,), 4),
        ]
        act_bytes = 3 * tile_b * _round_up(hid, 128) * 4

    # Honest VMEM budget: every pipeline block is double-buffered (weights included,
    # since we don't shrink their buffer count), plus in-kernel activation
    # temporaries, plus headroom; capped at 48 MiB (< v7x's 64 MiB physical VMEM).
    vmem_est = 2 * sum(_block_bytes(s, isz) for s, isz in pipeline_blocks) + act_bytes
    vmem_limit = int(min(48 << 20, vmem_est + (16 << 20)))

    # Advisory cost estimate so XLA can schedule HBM-heavy neighbors around this
    # memory-bound kernel.
    flops = int(2 * B_pad * (obs_dims * hid + hid * hid + hid))
    bytes_accessed = int(sum(int(a.size) * a.dtype.itemsize for a in operands)) + B_pad * 4
    cost = pl.CostEstimate(flops=flops, transcendentals=0, bytes_accessed=bytes_accessed)

    out = pl.pallas_call(
        kernel,
        out_shape=out_shape,
        grid_spec=pltpu.PrefetchScalarGridSpec(
            num_scalar_prefetch=0,
            grid=grid,
            in_specs=in_specs,
            out_specs=out_specs,
        ),
        compiler_params=pltpu.CompilerParams(
            dimension_semantics=("parallel",),   # shard grid steps across TCs (v7x)
            vmem_limit_bytes=vmem_limit,
        ),
        cost_estimate=cost,
    )(*operands)

    if use_packed:
        return out.reshape(B_pad, 1)[:B]         # flat (i, j) -> logical row i*pack + j
    return out[:B].reshape(B, 1)


# ----------------------------------------------------------------------- init / ref
def init_value_network_params(key, obs_space_dims: int, hidden_dims: int):
    """Deterministic init mimicking PyTorch nn.Linear default (U[-1/sqrt(fan_in), +])."""
    ks = jax.random.split(key, 6)

    def uni(k, shape, fan_in):
        bound = 1.0 / jnp.sqrt(jnp.float32(fan_in))
        return jax.random.uniform(k, shape, jnp.float32, -bound, bound)

    return {
        "w1": uni(ks[0], (obs_space_dims, hidden_dims), obs_space_dims),
        "b1": uni(ks[1], (1, hidden_dims), obs_space_dims),
        "w2": uni(ks[2], (hidden_dims, hidden_dims), hidden_dims),
        "b2": uni(ks[3], (1, hidden_dims), hidden_dims),
        "w3": uni(ks[4], (hidden_dims, 1), hidden_dims),
        "b3": uni(ks[5], (1,), hidden_dims),
    }


def _reference_forward(x, p):
    h1 = jnp.maximum(x.astype(jnp.float32) @ p["w1"] + p["b1"], 0.0)
    h2 = jnp.maximum(h1 @ p["w2"] + p["b2"], 0.0)
    return h2 @ p["w3"] + p["b3"]


if __name__ == "__main__":
    key = jax.random.PRNGKey(0)
    k_x, k_p = jax.random.split(key)

    # Small, module-consistent shapes; ragged B exercises the padding path and the
    # >=2-step grid clamp; obs=16 exercises the lane-dense packed path (pack=8).
    B, obs_space_dims, hidden_dims = 1000, 16, 32
    x = jax.random.normal(k_x, (B, obs_space_dims), jnp.float32)
    params = init_value_network_params(k_p, obs_space_dims, hidden_dims)
    ref = _reference_forward(x, params)

    # Packed f32 path with an explicit small tile (1000 -> 1024 rows -> 4 grid steps).
    value = value_network_forward(x, params, tile_b=256)
    jax.block_until_ready(value)
    assert value.shape == (B, 1) and value.dtype == jnp.float32
    assert jnp.allclose(value, ref, atol=1e-4, rtol=1e-4)

    # Default-tile path (clamp keeps >= 2 grid steps: 1000 -> 2 x 512-row tiles).
    value_default = value_network_forward(x, params)
    jax.block_until_ready(value_default)
    assert jnp.allclose(value_default, ref, atol=1e-4, rtol=1e-4)

    # bf16 x-stream variant (halves the dominant HBM read; f32 accumulation kept).
    value_bf16 = value_network_forward(x, params, use_bf16_inputs=True)
    jax.block_until_ready(value_bf16)
    assert jnp.allclose(value_bf16, ref, atol=5e-2, rtol=5e-2)

    # Fallback (un-packed) path: obs_dims that does not divide 128.
    obs2 = 12
    x2 = jax.random.normal(k_x, (257, obs2), jnp.float32)
    params2 = init_value_network_params(k_p, obs2, hidden_dims)
    v2 = value_network_forward(x2, params2)
    jax.block_until_ready(v2)
    assert v2.shape == (257, 1)
    assert jnp.allclose(v2, _reference_forward(x2, params2), atol=1e-4, rtol=1e-4)

    print("KERNEL_OK")
</pallas_src>

<mosaic_0001>
module attributes {stable_mosaic.version = 11 : i64} {
  func.func @_mlp_packed_kernel(%arg0: i32, %arg1: memref<32x128xf32, #tpu.memory_space<vmem>>, %arg2: memref<128x256xf32, #tpu.memory_space<vmem>>, %arg3: memref<1x256xf32, #tpu.memory_space<vmem>>, %arg4: memref<256x256xf32, #tpu.memory_space<vmem>>, %arg5: memref<1x256xf32, #tpu.memory_space<vmem>>, %arg6: memref<256x8xf32, #tpu.memory_space<vmem>>, %arg7: memref<1xf32, #tpu.memory_space<smem>>, %arg8: memref<32x8xf32, #tpu.memory_space<vmem>>) attributes {dimension_semantics = [#tpu.dimension_semantics<parallel>], iteration_bounds = array<i64: 4>, scalar_prefetch = 0 : i64, scratch_operands = 0 : i64, tpu.core_type = #tpu.core_type<tc>, window_params = [{transform_indices = @transform_0, window_bounds = array<i64: 32, 128>}, {pipeline_mode = #tpu.pipeline_mode<synchronous>, transform_indices = @transform_1, window_bounds = array<i64: 128, 256>}, {pipeline_mode = #tpu.pipeline_mode<synchronous>, transform_indices = @transform_2, window_bounds = array<i64: 1, 256>}, {pipeline_mode = #tpu.pipeline_mode<synchronous>, transform_indices = @transform_3, window_bounds = array<i64: 256, 256>}, {pipeline_mode = #tpu.pipeline_mode<synchronous>, transform_indices = @transform_4, window_bounds = array<i64: 1, 256>}, {pipeline_mode = #tpu.pipeline_mode<synchronous>, transform_indices = @transform_5, window_bounds = array<i64: 256, 8>}, {transform_indices = @transform_6, window_bounds = array<i64: 1>}, {transform_indices = @transform_7, window_bounds = array<i64: 32, 8>}]} {
    %c0 = arith.constant 0 : index
    %c0_0 = arith.constant 0 : index
    %0 = vector.load %arg1[%c0, %c0_0] : memref<32x128xf32, #tpu.memory_space<vmem>>, vector<32x128xf32>
    %c0_1 = arith.constant 0 : index
    %c0_2 = arith.constant 0 : index
    %1 = vector.load %arg2[%c0_1, %c0_2] : memref<128x256xf32, #tpu.memory_space<vmem>>, vector<128x256xf32>
    %cst = arith.constant dense<0.000000e+00> : vector<32x256xf32>
    %2 = tpu.matmul %0, %1, %cst {dimension_numbers = #tpu.dot_dimension_numbers<[1], [0], [0], [1], [0, 0, 1, 1], [], []>} : vector<32x128xf32>, vector<128x256xf32>, vector<32x256xf32> -> vector<32x256xf32>
    %c0_3 = arith.constant 0 : index
    %c0_4 = arith.constant 0 : index
    %3 = vector.load %arg3[%c0_3, %c0_4] : memref<1x256xf32, #tpu.memory_space<vmem>>, vector<1x256xf32>
    %4 = vector.broadcast %3 : vector<1x256xf32> to vector<32x256xf32>
    %5 = arith.addf %2, %4 : vector<32x256xf32>
    %cst_5 = arith.constant 0.000000e+00 : f32
    %6 = vector.broadcast %cst_5 : f32 to vector<32x256xf32>
    %7 = arith.maximumf %5, %6 : vector<32x256xf32>
    %c0_6 = arith.constant 0 : index
    %c0_7 = arith.constant 0 : index
    %8 = vector.load %arg4[%c0_6, %c0_7] : memref<256x256xf32, #tpu.memory_space<vmem>>, vector<256x256xf32>
    %cst_8 = arith.constant dense<0.000000e+00> : vector<32x256xf32>
    %9 = tpu.matmul %7, %8, %cst_8 {dimension_numbers = #tpu.dot_dimension_numbers<[1], [0], [0], [1], [0, 0, 1, 1], [], []>} : vector<32x256xf32>, vector<256x256xf32>, vector<32x256xf32> -> vector<32x256xf32>
    %c0_9 = arith.constant 0 : index
    %c0_10 = arith.constant 0 : index
    %10 = vector.load %arg5[%c0_9, %c0_10] : memref<1x256xf32, #tpu.memory_space<vmem>>, vector<1x256xf32>
    %11 = vector.broadcast %10 : vector<1x256xf32> to vector<32x256xf32>
    %12 = arith.addf %9, %11 : vector<32x256xf32>
    %cst_11 = arith.constant 0.000000e+00 : f32
    %13 = vector.broadcast %cst_11 : f32 to vector<32x256xf32>
    %14 = arith.maximumf %12, %13 : vector<32x256xf32>
    %c0_12 = arith.constant 0 : index
    %c0_13 = arith.constant 0 : index
    %15 = vector.load %arg6[%c0_12, %c0_13] : memref<256x8xf32, #tpu.memory_space<vmem>>, vector<256x8xf32>
    %cst_14 = arith.constant dense<0.000000e+00> : vector<32x8xf32>
    %16 = tpu.matmul %14, %15, %cst_14 {dimension_numbers = #tpu.dot_dimension_numbers<[1], [0], [0], [1], [0, 0, 1, 1], [], []>} : vector<32x256xf32>, vector<256x8xf32>, vector<32x8xf32> -> vector<32x8xf32>
    %c0_15 = arith.constant 0 : index
    %17 = memref.load %arg7[%c0_15] : memref<1xf32, #tpu.memory_space<smem>>
    %18 = vector.broadcast %17 : f32 to vector<32x8xf32>
    %19 = arith.addf %16, %18 : vector<32x8xf32>
    %c0_16 = arith.constant 0 : index
    %c0_17 = arith.constant 0 : index
    %20 = vector.load %arg8[%c0_16, %c0_17] : memref<32x8xf32, #tpu.memory_space<vmem>>, vector<32x8xf32>
    tpu.vector_store %arg8[%c0_16, %c0_17], %19 {strides = array<i32>} : memref<32x8xf32, #tpu.memory_space<vmem>>, vector<32x8xf32>,
    return
  }
  func.func @transform_0(%arg0: i32) -> (i32, i32) {
    %c0_i32 = arith.constant 0 : i32
    %c0_i32_0 = arith.constant 0 : i32
    return %arg0, %c0_i32 : i32, i32
  }
  func.func @transform_1(%arg0: i32) -> (i32, i32) {
    %c0_i32 = arith.constant 0 : i32
    %c0_i32_0 = arith.constant 0 : i32
    %c0_i32_1 = arith.constant 0 : i32
    return %c0_i32, %c0_i32_0 : i32, i32
  }
  func.func @transform_2(%arg0: i32) -> (i32, i32) {
    %c0_i32 = arith.constant 0 : i32
    %c0_i32_0 = arith.constant 0 : i32
    %c0_i32_1 = arith.constant 0 : i32
    return %c0_i32, %c0_i32_0 : i32, i32
  }
  func.func @transform_3(%arg0: i32) -> (i32, i32) {
    %c0_i32 = arith.constant 0 : i32
    %c0_i32_0 = arith.constant 0 : i32
    %c0_i32_1 = arith.constant 0 : i32
    return %c0_i32, %c0_i32_0 : i32, i32
  }
  func.func @transform_4(%arg0: i32) -> (i32, i32) {
    %c0_i32 = arith.constant 0 : i32
    %c0_i32_0 = arith.constant 0 : i32
    %c0_i32_1 = arith.constant 0 : i32
    return %c0_i32, %c0_i32_0 : i32, i32
  }
  func.func @transform_5(%arg0: i32) -> (i32, i32) {
    %c0_i32 = arith.constant 0 : i32
    %c0_i32_0 = arith.constant 0 : i32
    %c0_i32_1 = arith.constant 0 : i32
    return %c0_i32, %c0_i32_0 : i32, i32
  }
  func.func @transform_6(%arg0: i32) -> i32 {
    %c0_i32 = arith.constant 0 : i32
    %c0_i32_0 = arith.constant 0 : i32
    return %c0_i32 : i32
  }
  func.func @transform_7(%arg0: i32) -> (i32, i32) {
    %c0_i32 = arith.constant 0 : i32
    %c0_i32_0 = arith.constant 0 : i32
    return %arg0, %c0_i32 : i32, i32
  }
}

</mosaic_0001>

<llo_original>
// kernel: value_network_forward.1
$region0: #{value_network_forward.1}
  #allocation0 [shape = 'u32[]', space=smem, size = 0x4, offset = 0x4, fixed_abs, tag = 'smem constant byte address 0x4 - core index']
  #allocation1 [shape = 'u32[72,128]{1,0:T(1,128)}', space=vmem, size = 0x9000, scoped, tag = 'internal scratch']
  #allocation2 [shape = 'f32[1]{0:T(128)S(6)}', space=smem, size = 0x200, scoped, tag = 'scoped memory for value_network_forward.1']
  %s0 = inlined_call_operand.vmem [shape: f32[128,128], index: 0, kind: input, shape index: {}]
  %s1 = inlined_call_operand.vmem [shape: f32[128,256], index: 1, kind: input, shape index: {}]
  %s2 = inlined_call_operand.vmem [shape: f32[1,256], index: 2, kind: input, shape index: {}]
  %s3 = inlined_call_operand.vmem [shape: f32[256,256], index: 3, kind: input, shape index: {}]
  %s4 = inlined_call_operand.vmem [shape: f32[1,256], index: 4, kind: input, shape index: {}]
  %s5 = inlined_call_operand.vmem [shape: f32[256,8], index: 5, kind: input, shape index: {}]
  %s6 = inlined_call_operand.<no memory space> [shape: f32[1], index: 6, kind: input, shape index: {}]
  %s7 = inlined_call_operand.vmem [shape: f32[128,8], index: 7, kind: output, shape index: {}]
  %s8 = sld [smem:[#allocation0]]
  $region61: #{value_network_forward.1} parent=0
    _
  %s10 = ssub.s32 1, %s8
  %s11 = scalar_select 0, %s10, %s8
  %12 = sst [smem:[#allocation2]] %s6
  loop: start=0, step=1, limit=6
  $region2: #{value_network_forward.1} parent=0 // loop_pre_header
    _
  $region3: #{value_network_forward.1} parent=0 // loop_header
    %s14 = sphi 0, %s18
    %p15 = scmp.ge.s32.totalorder %s14, 6
    %s24 = sphi 0, %s26
    %s27 = sphi 0, %s24
    %s28 = sphi 0, %s27
    %s44 = sphi 0, %s28
    %s48 = sphi 0, %s48
    %s50 = sphi 0, %s48
    %s51 = sphi 0, %s50
    %s65 = sphi 0, %s51
    %s69 = sphi 0, %s69
    %s71 = sphi 0, %s69
    %s72 = sphi 0, %s71
    %s86 = sphi 0, %s72
    %s90 = sphi 0, %s90
    %s92 = sphi 0, %s90
    %s93 = sphi 0, %s92
    %s107 = sphi 0, %s93
    %s111 = sphi 0, %s111
    %s113 = sphi 0, %s111
    %s114 = sphi 0, %s113
    %s128 = sphi 0, %s114
    %s132 = sphi 0, %s132
    %s134 = sphi 0, %s132
    %s135 = sphi 0, %s134
    %s149 = sphi 0, %s135
    %s153 = sphi 0, %s153
    %s155 = sphi 0, %s153
    %s156 = sphi 0, %s155
    %s170 = sphi 0, %s156
    %s176 = sphi 0, %s178
    %s179 = sphi 0, %s176
    %s180 = sphi 0, %s179
    %s196 = sphi 0, %s180
  $region4: #{value_network_forward.1} parent=0 // loop_header_branch
    %17 = sbr.rel (%p15) target = $region8
  $region5: #{value_network_forward.1} parent=0 // loop_body
    %s19 = ssub.s32 %s14, 1
    %s20 = ssub.s32 %s14, 2
    %s21 = sadd.s32 %s14, 1
    %s22 = ssub.s32 %s14, %s21
    %p23 = scmp.eq.s32.totalorder %s22, 0
    %s25 = sadd.s32 %s24, 1
    %s26 = scalar_select %p23, %s24, %s25
    %p29 = pneg %p23
    %p30 = scmp.eq.s32.totalorder %s14, 3
    %p31 = por %p29, %p30
    %p32 = scmp.ne.s32.totalorder %s24, %s27
    %p33 = scmp.eq.s32.totalorder %s14, 0
    %p34 = por %p32, %p33
    %p35 = scmp.ne.s32.totalorder %s24, %s27
    %p36 = scmp.eq.s32.totalorder %s19, 3
    %p37 = por %p35, %p36
    %p38 = scmp.ne.s32.totalorder %s27, %s28
    %p39 = scmp.eq.s32.totalorder %s19, 0
    %p40 = por %p38, %p39
    %p41 = scmp.ne.s32.totalorder %s27, %s28
    %p42 = scmp.eq.s32.totalorder %s20, 3
    %p43 = por %p41, %p42
    %p45 = scmp.ne.s32.totalorder %s28, %s44
    %p46 = scmp.eq.s32.totalorder %s20, 0
    %p47 = por %p45, %p46
    %s49 = sadd.s32 %s48, 1
    %p52 = scmp.eq.s32.totalorder %s14, 3
    %p53 = scmp.ne.s32.totalorder %s48, %s50
    %p54 = scmp.eq.s32.totalorder %s14, 0
    %p55 = por %p53, %p54
    %p56 = scmp.ne.s32.totalorder %s48, %s50
    %p57 = scmp.eq.s32.totalorder %s19, 3
    %p58 = por %p56, %p57
    %p59 = scmp.ne.s32.totalorder %s50, %s51
    %p60 = scmp.eq.s32.totalorder %s19, 0
    %p61 = por %p59, %p60
    %p62 = scmp.ne.s32.totalorder %s50, %s51
    %p63 = scmp.eq.s32.totalorder %s20, 3
    %p64 = por %p62, %p63
    %p66 = scmp.ne.s32.totalorder %s51, %s65
    %p67 = scmp.eq.s32.totalorder %s20, 0
    %p68 = por %p66, %p67
    %s70 = sadd.s32 %s69, 1
    %p73 = scmp.eq.s32.totalorder %s14, 3
    %p74 = scmp.ne.s32.totalorder %s69, %s71
    %p75 = scmp.eq.s32.totalorder %s14, 0
    %p76 = por %p74, %p75
    %p77 = scmp.ne.s32.totalorder %s69, %s71
    %p78 = scmp.eq.s32.totalorder %s19, 3
    %p79 = por %p77, %p78
    %p80 = scmp.ne.s32.totalorder %s71, %s72
    %p81 = scmp.eq.s32.totalorder %s19, 0
    %p82 = por %p80, %p81
    %p83 = scmp.ne.s32.totalorder %s71, %s72
    %p84 = scmp.eq.s32.totalorder %s20, 3
    %p85 = por %p83, %p84
    %p87 = scmp.ne.s32.totalorder %s72, %s86
    %p88 = scmp.eq.s32.totalorder %s20, 0
    %p89 = por %p87, %p88
    %s91 = sadd.s32 %s90, 1
    %p94 = scmp.eq.s32.totalorder %s14, 3
    %p95 = scmp.ne.s32.totalorder %s90, %s92
    %p96 = scmp.eq.s32.totalorder %s14, 0
    %p97 = por %p95, %p96
    %p98 = scmp.ne.s32.totalorder %s90, %s92
    %p99 = scmp.eq.s32.totalorder %s19, 3
    %p100 = por %p98, %p99
    %p101 = scmp.ne.s32.totalorder %s92, %s93
    %p102 = scmp.eq.s32.totalorder %s19, 0
    %p103 = por %p101, %p102
    %p104 = scmp.ne.s32.totalorder %s92, %s93
    %p105 = scmp.eq.s32.totalorder %s20, 3
    %p106 = por %p104, %p105
    %p108 = scmp.ne.s32.totalorder %s93, %s107
    %p109 = scmp.eq.s32.totalorder %s20, 0
    %p110 = por %p108, %p109
    %s112 = sadd.s32 %s111, 1
    %p115 = scmp.eq.s32.totalorder %s14, 3
    %p116 = scmp.ne.s32.totalorder %s111, %s113
    %p117 = scmp.eq.s32.totalorder %s14, 0
    %p118 = por %p116, %p117
    %p119 = scmp.ne.s32.totalorder %s111, %s113
    %p120 = scmp.eq.s32.totalorder %s19, 3
    %p121 = por %p119, %p120
    %p122 = scmp.ne.s32.totalorder %s113, %s114
    %p123 = scmp.eq.s32.totalorder %s19, 0
    %p124 = por %p122, %p123
    %p125 = scmp.ne.s32.totalorder %s113, %s114
    %p126 = scmp.eq.s32.totalorder %s20, 3
    %p127 = por %p125, %p126
    %p129 = scmp.ne.s32.totalorder %s114, %s128
    %p130 = scmp.eq.s32.totalorder %s20, 0
    %p131 = por %p129, %p130
    %s133 = sadd.s32 %s132, 1
    %p136 = scmp.eq.s32.totalorder %s14, 3
    %p137 = scmp.ne.s32.totalorder %s132, %s134
    %p138 = scmp.eq.s32.totalorder %s14, 0
    %p139 = por %p137, %p138
    %p140 = scmp.ne.s32.totalorder %s132, %s134
    %p141 = scmp.eq.s32.totalorder %s19, 3
    %p142 = por %p140, %p141
    %p143 = scmp.ne.s32.totalorder %s134, %s135
    %p144 = scmp.eq.s32.totalorder %s19, 0
    %p145 = por %p143, %p144
    %p146 = scmp.ne.s32.totalorder %s134, %s135
    %p147 = scmp.eq.s32.totalorder %s20, 3
    %p148 = por %p146, %p147
    %p150 = scmp.ne.s32.totalorder %s135, %s149
    %p151 = scmp.eq.s32.totalorder %s20, 0
    %p152 = por %p150, %p151
    %s154 = sadd.s32 %s153, 1
    %p157 = scmp.eq.s32.totalorder %s14, 3
    %p158 = scmp.ne.s32.totalorder %s153, %s155
    %p159 = scmp.eq.s32.totalorder %s14, 0
    %p160 = por %p158, %p159
    %p161 = scmp.ne.s32.totalorder %s153, %s155
    %p162 = scmp.eq.s32.totalorder %s19, 3
    %p163 = por %p161, %p162
    %p164 = scmp.ne.s32.totalorder %s155, %s156
    %p165 = scmp.eq.s32.totalorder %s19, 0
    %p166 = por %p164, %p165
    %p167 = scmp.ne.s32.totalorder %s155, %s156
    %p168 = scmp.eq.s32.totalorder %s20, 3
    %p169 = por %p167, %p168
    %p171 = scmp.ne.s32.totalorder %s156, %s170
    %p172 = scmp.eq.s32.totalorder %s20, 0
    %p173 = por %p171, %p172
    %s174 = ssub.s32 %s14, %s21
    %p175 = scmp.eq.s32.totalorder %s174, 0
    %s177 = sadd.s32 %s176, 1
    %s178 = scalar_select %p175, %s176, %s177
    %p181 = pneg %p175
    %p182 = scmp.eq.s32.totalorder %s14, 3
    %p183 = por %p181, %p182
    %p184 = scmp.ne.s32.totalorder %s176, %s179
    %p185 = scmp.eq.s32.totalorder %s14, 0
    %p186 = por %p184, %p185
    %p187 = scmp.ne.s32.totalorder %s176, %s179
    %p188 = scmp.eq.s32.totalorder %s19, 3
    %p189 = por %p187, %p188
    %p190 = scmp.ne.s32.totalorder %s179, %s180
    %p191 = scmp.eq.s32.totalorder %s19, 0
    %p192 = por %p190, %p191
    %p193 = scmp.ne.s32.totalorder %s179, %s180
    %p194 = scmp.eq.s32.totalorder %s20, 3
    %p195 = por %p193, %p194
    %p197 = scmp.ne.s32.totalorder %s180, %s196
    %p198 = scmp.eq.s32.totalorder %s20, 0
    %p199 = por %p197, %p198
    %p200 = scmp.le.s32.totalorder 1, %s14
    %p201 = scmp.lt.s32.totalorder %s14, 5
    %p202 = pnand %p200, %p201
    %p203 = pneg %p202
    // Predicated region
    $region9: #{value_network_forward.1} parent=5 // pred_check
      _
    $region10: #{value_network_forward.1} parent=5 // pred_check_branch
      %205 = sbr.rel (%p202) target = $region12
    $region11: #{value_network_forward.1} parent=5 // pred_region
      %s206 = ssub.s32 %s14, 1
      // Predicated region
      $region13: #{value_network_forward.1} parent=11 // pred_check
        %p207 = pneg %p61
      $region14: #{value_network_forward.1} parent=11 // pred_check_branch
        %209 = sbr.rel (%p207) target = $region16
      $region15: #{value_network_forward.1} parent=11 // pred_region
        _
      $region16: #{value_network_forward.1} parent=11 // pred_fallthru
        _
      // Predicated region
      $region17: #{value_network_forward.1} parent=11 // pred_check
        %p210 = pneg %p82
      $region18: #{value_network_forward.1} parent=11 // pred_check_branch
        %212 = sbr.rel (%p210) target = $region20
      $region19: #{value_network_forward.1} parent=11 // pred_region
        _
      $region20: #{value_network_forward.1} parent=11 // pred_fallthru
        _
      // Predicated region
      $region21: #{value_network_forward.1} parent=11 // pred_check
        %p213 = pneg %p103
      $region22: #{value_network_forward.1} parent=11 // pred_check_branch
        %215 = sbr.rel (%p213) target = $region24
      $region23: #{value_network_forward.1} parent=11 // pred_region
        _
      $region24: #{value_network_forward.1} parent=11 // pred_fallthru
        _
      // Predicated region
      $region25: #{value_network_forward.1} parent=11 // pred_check
        %p216 = pneg %p124
      $region26: #{value_network_forward.1} parent=11 // pred_check_branch
        %218 = sbr.rel (%p216) target = $region28
      $region27: #{value_network_forward.1} parent=11 // pred_region
        _
      $region28: #{value_network_forward.1} parent=11 // pred_fallthru
        _
      // Predicated region
      $region29: #{value_network_forward.1} parent=11 // pred_check
        %p219 = pneg %p145
      $region30: #{value_network_forward.1} parent=11 // pred_check_branch
        %221 = sbr.rel (%p219) target = $region32
      $region31: #{value_network_forward.1} parent=11 // pred_region
        _
      $region32: #{value_network_forward.1} parent=11 // pred_fallthru
        _
      // Predicated region
      $region33: #{value_network_forward.1} parent=11 // pred_check
        %p222 = pneg %p166
      $region34: #{value_network_forward.1} parent=11 // pred_check_branch
        %224 = sbr.rel (%p222) target = $region36
      $region35: #{value_network_forward.1} parent=11 // pred_region
        _
      $region36: #{value_network_forward.1} parent=11 // pred_fallthru
        _
    $region12: #{value_network_forward.1} parent=5 // pred_fallthru
      _
    %p225 = scmp.lt.s32.totalorder %s14, 4
    // Predicated region
    $region37: #{value_network_forward.1} parent=5 // pred_check
      %p226 = pneg %p225
    $region38: #{value_network_forward.1} parent=5 // pred_check_branch
      %228 = sbr.rel (%p226) target = $region40
    $region39: #{value_network_forward.1} parent=5 // pred_region
      // Predicated region
      $region41: #{value_network_forward.1} parent=39 // pred_check
        %p229 = pneg %p34
      $region42: #{value_network_forward.1} parent=39 // pred_check_branch
        %231 = sbr.rel (%p229) target = $region44
      $region43: #{value_network_forward.1} parent=39 // pred_region
        %s232 = smul.u32 4, %s14
        %p233 = scmp.lt.s32.totalorder %s232, 15
        %s234 = scalar_select %p233, %s232, 15
        %s235 = smul.addr %s234, 8
        %s236 = scalar_lea.vmem %s0, %s235
        %s237 = smul.u32 4, %s14
      $region44: #{value_network_forward.1} parent=39 // pred_fallthru
        _
    $region40: #{value_network_forward.1} parent=5 // pred_fallthru
      _
    %p238 = scmp.le.s32.totalorder 1, %s14
    %p239 = scmp.lt.s32.totalorder %s14, 5
    %p240 = pnand %p238, %p239
    %p241 = pneg %p240
    // Predicated region
    $region45: #{value_network_forward.1} parent=5 // pred_check
      _
    $region46: #{value_network_forward.1} parent=5 // pred_check_branch
      %243 = sbr.rel (%p240) target = $region48
    $region47: #{value_network_forward.1} parent=5 // pred_region
      %s244 = ssub.s32 %s14, 1
      %s245 = smul.u32 4, %s19
      %p246 = scmp.lt.s32.totalorder %s245, 15
      %s247 = scalar_select %p246, %s245, 15
      %s248 = smul.addr %s247, 8
      %s249 = scalar_lea.vmem %s0, %s248
      %p250 = pneg %p40
      %p251 = pneg %p37
      %p252 = pneg %p61
      %p253 = pneg %p58
      %p254 = pneg %p82
      %p255 = pneg %p79
      %p256 = pneg %p103
      %p257 = pneg %p100
      %p258 = pneg %p124
      %p259 = pneg %p121
      %p260 = pneg %p145
      %p261 = pneg %p142
      %p262 = pneg %p166
      %p263 = pneg %p163
      %p264 = pneg %p192
      %p265 = pneg %p189
      %s266 = smul.u32 4, %s19
      %p267 = scmp.lt.s32.totalorder %s266, 15
      %s268 = scalar_select %p267, %s266, 15
      %s269 = smul.addr %s268, 8
      %s270 = scalar_lea.vmem %s7, %s269
      %s271 = smul.u32 4, %s19
      %p272 = scmp.lt.s32.totalorder %s271, 15
      %s273 = scalar_select %p272, %s271, 15
      %s274 = smul.addr %s273, 8
      %s275 = scalar_lea.vmem %s0, %s274
      %s276 = smul.u32 4, %s19
      %s277 = smul.u32 4, %s19
      %p278 = scmp.lt.s32.totalorder %s277, 15
      %s279 = scalar_select %p278, %s277, 15
      %s280 = smul.addr %s279, 8
      %s281 = scalar_lea.vmem %s7, %s280
      %s282 = smul.u32 4, %s19
      %v283 = vld [vmem:[%s275] sm:$0xff]
      %v284 = vld [vmem:[%s275 + $0x8] sm:$0xff]
      %v285 = vld [vmem:[%s275 + $0x10] sm:$0xff]
      %v286 = vld [vmem:[%s275 + $0x18] sm:$0xff]
      %v287 = vld [vmem:[%s1] sm:$0xff]
      %v288 = vld [vmem:[%s1 + $0x8] sm:$0xff]
      %v289 = vld [vmem:[%s1 + $0x10] sm:$0xff]
      %v290 = vld [vmem:[%s1 + $0x18] sm:$0xff]
      %v291 = vld [vmem:[%s1 + $0x20] sm:$0xff]
      %v292 = vld [vmem:[%s1 + $0x28] sm:$0xff]
      %v293 = vld [vmem:[%s1 + $0x30] sm:$0xff]
      %v294 = vld [vmem:[%s1 + $0x38] sm:$0xff]
      %v295 = vld [vmem:[%s1 + $0x40] sm:$0xff]
      %v296 = vld [vmem:[%s1 + $0x48] sm:$0xff]
      %v297 = vld [vmem:[%s1 + $0x50] sm:$0xff]
      %v298 = vld [vmem:[%s1 + $0x58] sm:$0xff]
      %v299 = vld [vmem:[%s1 + $0x60] sm:$0xff]
      %v300 = vld [vmem:[%s1 + $0x68] sm:$0xff]
      %v301 = vld [vmem:[%s1 + $0x70] sm:$0xff]
      %v302 = vld [vmem:[%s1 + $0x78] sm:$0xff]
      %v303 = vld [vmem:[%s1 + $0x80] sm:$0xff]
      %v304 = vld [vmem:[%s1 + $0x88] sm:$0xff]
      %v305 = vld [vmem:[%s1 + $0x90] sm:$0xff]
      %v306 = vld [vmem:[%s1 + $0x98] sm:$0xff]
      %v307 = vld [vmem:[%s1 + $0xa0] sm:$0xff]
      %v308 = vld [vmem:[%s1 + $0xa8] sm:$0xff]
      %v309 = vld [vmem:[%s1 + $0xb0] sm:$0xff]
      %v310 = vld [vmem:[%s1 + $0xb8] sm:$0xff]
      %v311 = vld [vmem:[%s1 + $0xc0] sm:$0xff]
      %v312 = vld [vmem:[%s1 + $0xc8] sm:$0xff]
      %v313 = vld [vmem:[%s1 + $0xd0] sm:$0xff]
      %v314 = vld [vmem:[%s1 + $0xd8] sm:$0xff]
      %v315 = vld [vmem:[%s1 + $0xe0] sm:$0xff]
      %v316 = vld [vmem:[%s1 + $0xe8] sm:$0xff]
      %v317 = vld [vmem:[%s1 + $0xf0] sm:$0xff]
      %v318 = vld [vmem:[%s1 + $0xf8] sm:$0xff]
      %v319 = vld [vmem:[%s2] sm:$0x3]
      %v321 = vperm.slane %v319, 0
      %v322 = vperm.slane %v319, 1
      %325 = vmatpush.msra.mxu0 %v317
      %326 = vmatpush.msra.mxu0 %v315
      %327 = vmatpush.msra.mxu0 %v313
      %328 = vmatpush.msra.mxu0 %v311
      %329 = vmatpush.msra.mxu0 %v309
      %330 = vmatpush.msra.mxu0 %v307
      %331 = vmatpush.msra.mxu0 %v305
      %332 = vmatpush.msra.mxu0 %v303
      %333 = vmatpush.msra.mxu0 %v301
      %334 = vmatpush.msra.mxu0 %v299
      %335 = vmatpush.msra.mxu0 %v297
      %336 = vmatpush.msra.mxu0 %v295
      %337 = vmatpush.msra.mxu0 %v293
      %338 = vmatpush.msra.mxu0 %v291
      %339 = vmatpush.msra.mxu0 %v289
      %340 = vmatpush.msra.mxu0 %v287
      %341 = vmatmul.f32.gmra.mxu0 %v283
      %v342 = vpop.f32.mrf.mxu0
      %v343 = vadd.f32 %v321, %v342
      %344 = vmatmul.f32.gmra.mxu0 %v284
      %v345 = vpop.f32.mrf.mxu0
      %v346 = vadd.f32 %v321, %v345
      %347 = vmatmul.f32.gmra.mxu0 %v285
      %v348 = vpop.f32.mrf.mxu0
      %v349 = vadd.f32 %v321, %v348
      %350 = vmatmul.f32.gmra.mxu0 %v286
      %v351 = vpop.f32.mrf.mxu0
      %v352 = vadd.f32 %v321, %v351
      %353 = vdwg.mxu0
      %354 = vmatpush.msra.mxu0 %v318
      %355 = vmatpush.msra.mxu0 %v316
      %356 = vmatpush.msra.mxu0 %v314
      %357 = vmatpush.msra.mxu0 %v312
      %358 = vmatpush.msra.mxu0 %v310
      %359 = vmatpush.msra.mxu0 %v308
      %360 = vmatpush.msra.mxu0 %v306
      %361 = vmatpush.msra.mxu0 %v304
      %362 = vmatpush.msra.mxu0 %v302
      %363 = vmatpush.msra.mxu0 %v300
      %364 = vmatpush.msra.mxu0 %v298
      %365 = vmatpush.msra.mxu0 %v296
      %366 = vmatpush.msra.mxu0 %v294
      %367 = vmatpush.msra.mxu0 %v292
      %368 = vmatpush.msra.mxu0 %v290
      %369 = vmatpush.msra.mxu0 %v288
      %370 = vmatmul.f32.gmra.mxu0 %v283
      %v371 = vpop.f32.mrf.mxu0
      %v372 = vadd.f32 %v322, %v371
      %373 = vmatmul.f32.gmra.mxu0 %v284
      %v374 = vpop.f32.mrf.mxu0
      %v375 = vadd.f32 %v322, %v374
      %376 = vmatmul.f32.gmra.mxu0 %v285
      %v377 = vpop.f32.mrf.mxu0
      %v378 = vadd.f32 %v322, %v377
      %379 = vmatmul.f32.gmra.mxu0 %v286
      %v380 = vpop.f32.mrf.mxu0
      %v381 = vadd.f32 %v322, %v380
      %382 = vdwg.mxu0
      %v383 = vmax.f32 %v343, 0.0
      %v384 = vmax.f32 %v372, 0.0
      %v385 = vmax.f32 %v346, 0.0
      %v386 = vmax.f32 %v375, 0.0
      %v387 = vmax.f32 %v349, 0.0
      %v388 = vmax.f32 %v378, 0.0
      %v389 = vmax.f32 %v352, 0.0
      %v390 = vmax.f32 %v381, 0.0
      %v391 = vld [vmem:[%s3] sm:$0xff]
      %v392 = vld [vmem:[%s3 + $0x8] sm:$0xff]
      %v393 = vld [vmem:[%s3 + $0x10] sm:$0xff]
      %v394 = vld [vmem:[%s3 + $0x18] sm:$0xff]
      %v395 = vld [vmem:[%s3 + $0x20] sm:$0xff]
      %v396 = vld [vmem:[%s3 + $0x28] sm:$0xff]
      %v397 = vld [vmem:[%s3 + $0x30] sm:$0xff]
      %v398 = vld [vmem:[%s3 + $0x38] sm:$0xff]
      %v399 = vld [vmem:[%s3 + $0x40] sm:$0xff]
      %v400 = vld [vmem:[%s3 + $0x48] sm:$0xff]
      %v401 = vld [vmem:[%s3 + $0x50] sm:$0xff]
      %v402 = vld [vmem:[%s3 + $0x58] sm:$0xff]
      %v403 = vld [vmem:[%s3 + $0x60] sm:$0xff]
      %v404 = vld [vmem:[%s3 + $0x68] sm:$0xff]
      %v405 = vld [vmem:[%s3 + $0x70] sm:$0xff]
      %v406 = vld [vmem:[%s3 + $0x78] sm:$0xff]
      %v407 = vld [vmem:[%s3 + $0x80] sm:$0xff]
      %v408 = vld [vmem:[%s3 + $0x88] sm:$0xff]
      %v409 = vld [vmem:[%s3 + $0x90] sm:$0xff]
      %v410 = vld [vmem:[%s3 + $0x98] sm:$0xff]
      %v411 = vld [vmem:[%s3 + $0xa0] sm:$0xff]
      %v412 = vld [vmem:[%s3 + $0xa8] sm:$0xff]
      %v413 = vld [vmem:[%s3 + $0xb0] sm:$0xff]
      %v414 = vld [vmem:[%s3 + $0xb8] sm:$0xff]
      %v415 = vld [vmem:[%s3 + $0xc0] sm:$0xff]
      %v416 = vld [vmem:[%s3 + $0xc8] sm:$0xff]
      %v417 = vld [vmem:[%s3 + $0xd0] sm:$0xff]
      %v418 = vld [vmem:[%s3 + $0xd8] sm:$0xff]
      %v419 = vld [vmem:[%s3 + $0xe0] sm:$0xff]
      %v420 = vld [vmem:[%s3 + $0xe8] sm:$0xff]
      %v421 = vld [vmem:[%s3 + $0xf0] sm:$0xff]
      %v422 = vld [vmem:[%s3 + $0xf8] sm:$0xff]
      %v423 = vld [vmem:[%s3 + $0x100] sm:$0xff]
      %v424 = vld [vmem:[%s3 + $0x108] sm:$0xff]
      %v425 = vld [vmem:[%s3 + $0x110] sm:$0xff]
      %v426 = vld [vmem:[%s3 + $0x118] sm:$0xff]
      %v427 = vld [vmem:[%s3 + $0x120] sm:$0xff]
      %v428 = vld [vmem:[%s3 + $0x128] sm:$0xff]
      %v429 = vld [vmem:[%s3 + $0x130] sm:$0xff]
      %v430 = vld [vmem:[%s3 + $0x138] sm:$0xff]
      %v431 = vld [vmem:[%s3 + $0x140] sm:$0xff]
      %v432 = vld [vmem:[%s3 + $0x148] sm:$0xff]
      %v433 = vld [vmem:[%s3 + $0x150] sm:$0xff]
      %v434 = vld [vmem:[%s3 + $0x158] sm:$0xff]
      %v435 = vld [vmem:[%s3 + $0x160] sm:$0xff]
      %v436 = vld [vmem:[%s3 + $0x168] sm:$0xff]
      %v437 = vld [vmem:[%s3 + $0x170] sm:$0xff]
      %v438 = vld [vmem:[%s3 + $0x178] sm:$0xff]
      %v439 = vld [vmem:[%s3 + $0x180] sm:$0xff]
      %v440 = vld [vmem:[%s3 + $0x188] sm:$0xff]
      %v441 = vld [vmem:[%s3 + $0x190] sm:$0xff]
      %v442 = vld [vmem:[%s3 + $0x198] sm:$0xff]
      %v443 = vld [vmem:[%s3 + $0x1a0] sm:$0xff]
      %v444 = vld [vmem:[%s3 + $0x1a8] sm:$0xff]
      %v445 = vld [vmem:[%s3 + $0x1b0] sm:$0xff]
      %v446 = vld [vmem:[%s3 + $0x1b8] sm:$0xff]
      %v447 = vld [vmem:[%s3 + $0x1c0] sm:$0xff]
      %v448 = vld [vmem:[%s3 + $0x1c8] sm:$0xff]
      %v449 = vld [vmem:[%s3 + $0x1d0] sm:$0xff]
      %v450 = vld [vmem:[%s3 + $0x1d8] sm:$0xff]
      %v451 = vld [vmem:[%s3 + $0x1e0] sm:$0xff]
      %v452 = vld [vmem:[%s3 + $0x1e8] sm:$0xff]
      %v453 = vld [vmem:[%s3 + $0x1f0] sm:$0xff]
      %v454 = vld [vmem:[%s3 + $0x1f8] sm:$0xff]
      %v455 = vld [vmem:[%s4] sm:$0x3]
      %v457 = vperm.slane %v455, 0
      %v458 = vperm.slane %v455, 1
      %461 = vmatpush.msra.mxu0 %v421
      %462 = vmatpush.msra.mxu0 %v419
      %463 = vmatpush.msra.mxu0 %v417
      %464 = vmatpush.msra.mxu0 %v415
      %465 = vmatpush.msra.mxu0 %v413
      %466 = vmatpush.msra.mxu0 %v411
      %467 = vmatpush.msra.mxu0 %v409
      %468 = vmatpush.msra.mxu0 %v407
      %469 = vmatpush.msra.mxu0 %v405
      %470 = vmatpush.msra.mxu0 %v403
      %471 = vmatpush.msra.mxu0 %v401
      %472 = vmatpush.msra.mxu0 %v399
      %473 = vmatpush.msra.mxu0 %v397
      %474 = vmatpush.msra.mxu0 %v395
      %475 = vmatpush.msra.mxu0 %v393
      %476 = vmatpush.msra.mxu0 %v391
      %477 = vmatmul.f32.gmra.mxu0 %v383
      %v478 = vpop.f32.mrf.mxu0
      %v479 = vadd.f32 %v457, %v478
      %480 = vmatmul.f32.gmra.mxu0 %v385
      %v481 = vpop.f32.mrf.mxu0
      %v482 = vadd.f32 %v457, %v481
      %483 = vmatmul.f32.gmra.mxu0 %v387
      %v484 = vpop.f32.mrf.mxu0
      %v485 = vadd.f32 %v457, %v484
      %486 = vmatmul.f32.gmra.mxu0 %v389
      %v487 = vpop.f32.mrf.mxu0
      %v488 = vadd.f32 %v457, %v487
      %489 = vdwg.mxu0
      %490 = vmatpush.msra.mxu0 %v453
      %491 = vmatpush.msra.mxu0 %v451
      %492 = vmatpush.msra.mxu0 %v449
      %493 = vmatpush.msra.mxu0 %v447
      %494 = vmatpush.msra.mxu0 %v445
      %495 = vmatpush.msra.mxu0 %v443
      %496 = vmatpush.msra.mxu0 %v441
      %497 = vmatpush.msra.mxu0 %v439
      %498 = vmatpush.msra.mxu0 %v437
      %499 = vmatpush.msra.mxu0 %v435
      %500 = vmatpush.msra.mxu0 %v433
      %501 = vmatpush.msra.mxu0 %v431
      %502 = vmatpush.msra.mxu0 %v429
      %503 = vmatpush.msra.mxu0 %v427
      %504 = vmatpush.msra.mxu0 %v425
      %505 = vmatpush.msra.mxu0 %v423
      %506 = vmatmul.f32.gmra.mxu0 %v384
      %v507 = vpop.f32.mrf.mxu0
      %v508 = vadd.f32 %v479, %v507
      %509 = vmatmul.f32.gmra.mxu0 %v386
      %v510 = vpop.f32.mrf.mxu0
      %v511 = vadd.f32 %v482, %v510
      %512 = vmatmul.f32.gmra.mxu0 %v388
      %v513 = vpop.f32.mrf.mxu0
      %v514 = vadd.f32 %v485, %v513
      %515 = vmatmul.f32.gmra.mxu0 %v390
      %v516 = vpop.f32.mrf.mxu0
      %v517 = vadd.f32 %v488, %v516
      %518 = vdwg.mxu0
      %519 = vmatpush.msra.mxu0 %v422
      %520 = vmatpush.msra.mxu0 %v420
      %521 = vmatpush.msra.mxu0 %v418
      %522 = vmatpush.msra.mxu0 %v416
      %523 = vmatpush.msra.mxu0 %v414
      %524 = vmatpush.msra.mxu0 %v412
      %525 = vmatpush.msra.mxu0 %v410
      %526 = vmatpush.msra.mxu0 %v408
      %527 = vmatpush.msra.mxu0 %v406
      %528 = vmatpush.msra.mxu0 %v404
      %529 = vmatpush.msra.mxu0 %v402
      %530 = vmatpush.msra.mxu0 %v400
      %531 = vmatpush.msra.mxu0 %v398
      %532 = vmatpush.msra.mxu0 %v396
      %533 = vmatpush.msra.mxu0 %v394
      %534 = vmatpush.msra.mxu0 %v392
      %535 = vmatmul.f32.gmra.mxu0 %v383
      %v536 = vpop.f32.mrf.mxu0
      %v537 = vadd.f32 %v458, %v536
      %538 = vmatmul.f32.gmra.mxu0 %v385
      %v539 = vpop.f32.mrf.mxu0
      %v540 = vadd.f32 %v458, %v539
      %541 = vmatmul.f32.gmra.mxu0 %v387
      %v542 = vpop.f32.mrf.mxu0
      %v543 = vadd.f32 %v458, %v542
      %544 = vmatmul.f32.gmra.mxu0 %v389
      %v545 = vpop.f32.mrf.mxu0
      %v546 = vadd.f32 %v458, %v545
      %547 = vdwg.mxu0
      %548 = vmatpush.msra.mxu0 %v454
      %549 = vmatpush.msra.mxu0 %v452
      %550 = vmatpush.msra.mxu0 %v450
      %551 = vmatpush.msra.mxu0 %v448
      %552 = vmatpush.msra.mxu0 %v446
      %553 = vmatpush.msra.mxu0 %v444
      %554 = vmatpush.msra.mxu0 %v442
      %555 = vmatpush.msra.mxu0 %v440
      %556 = vmatpush.msra.mxu0 %v438
      %557 = vmatpush.msra.mxu0 %v436
      %558 = vmatpush.msra.mxu0 %v434
      %559 = vmatpush.msra.mxu0 %v432
      %560 = vmatpush.msra.mxu0 %v430
      %561 = vmatpush.msra.mxu0 %v428
      %562 = vmatpush.msra.mxu0 %v426
      %563 = vmatpush.msra.mxu0 %v424
      %564 = vmatmul.f32.gmra.mxu0 %v384
      %v565 = vpop.f32.mrf.mxu0
      %v566 = vadd.f32 %v537, %v565
      %567 = vmatmul.f32.gmra.mxu0 %v386
      %v568 = vpop.f32.mrf.mxu0
      %v569 = vadd.f32 %v540, %v568
      %570 = vmatmul.f32.gmra.mxu0 %v388
      %v571 = vpop.f32.mrf.mxu0
      %v572 = vadd.f32 %v543, %v571
      %573 = vmatmul.f32.gmra.mxu0 %v390
      %v574 = vpop.f32.mrf.mxu0
      %v575 = vadd.f32 %v546, %v574
      %576 = vdwg.mxu0
      %v577 = vmax.f32 %v508, 0.0
      %v578 = vmax.f32 %v566, 0.0
      %v579 = vmax.f32 %v511, 0.0
      %v580 = vmax.f32 %v569, 0.0
      %v581 = vmax.f32 %v514, 0.0
      %v582 = vmax.f32 %v572, 0.0
      %v583 = vmax.f32 %v517, 0.0
      %v584 = vmax.f32 %v575, 0.0
      %v585 = vld [vmem:[%s5] sm:$0xff]
      %v586 = vld [vmem:[%s5 + $0x8] sm:$0xff]
      %v587 = vld [vmem:[%s5 + $0x10] sm:$0xff]
      %v588 = vld [vmem:[%s5 + $0x18] sm:$0xff]
      %v589 = vld [vmem:[%s5 + $0x20] sm:$0xff]
      %v590 = vld [vmem:[%s5 + $0x28] sm:$0xff]
      %v591 = vld [vmem:[%s5 + $0x30] sm:$0xff]
      %v592 = vld [vmem:[%s5 + $0x38] sm:$0xff]
      %v593 = vld [vmem:[%s5 + $0x40] sm:$0xff]
      %v594 = vld [vmem:[%s5 + $0x48] sm:$0xff]
      %v595 = vld [vmem:[%s5 + $0x50] sm:$0xff]
      %v596 = vld [vmem:[%s5 + $0x58] sm:$0xff]
      %v597 = vld [vmem:[%s5 + $0x60] sm:$0xff]
      %v598 = vld [vmem:[%s5 + $0x68] sm:$0xff]
      %v599 = vld [vmem:[%s5 + $0x70] sm:$0xff]
      %v600 = vld [vmem:[%s5 + $0x78] sm:$0xff]
      %v601 = vld [vmem:[%s5 + $0x80] sm:$0xff]
      %v602 = vld [vmem:[%s5 + $0x88] sm:$0xff]
      %v603 = vld [vmem:[%s5 + $0x90] sm:$0xff]
      %v604 = vld [vmem:[%s5 + $0x98] sm:$0xff]
      %v605 = vld [vmem:[%s5 + $0xa0] sm:$0xff]
      %v606 = vld [vmem:[%s5 + $0xa8] sm:$0xff]
      %v607 = vld [vmem:[%s5 + $0xb0] sm:$0xff]
      %v608 = vld [vmem:[%s5 + $0xb8] sm:$0xff]
      %v609 = vld [vmem:[%s5 + $0xc0] sm:$0xff]
      %v610 = vld [vmem:[%s5 + $0xc8] sm:$0xff]
      %v611 = vld [vmem:[%s5 + $0xd0] sm:$0xff]
      %v612 = vld [vmem:[%s5 + $0xd8] sm:$0xff]
      %v613 = vld [vmem:[%s5 + $0xe0] sm:$0xff]
      %v614 = vld [vmem:[%s5 + $0xe8] sm:$0xff]
      %v615 = vld [vmem:[%s5 + $0xf0] sm:$0xff]
      %v616 = vld [vmem:[%s5 + $0xf8] sm:$0xff]
      %s617 = sld [smem:[#allocation2]]
      %v618 = vstv %s617
      %619 = vmatpush.msra.mxu0 %v600
      %620 = vmatpush.msra.mxu0 %v599
      %621 = vmatpush.msra.mxu0 %v598
      %622 = vmatpush.msra.mxu0 %v597
      %623 = vmatpush.msra.mxu0 %v596
      %624 = vmatpush.msra.mxu0 %v595
      %625 = vmatpush.msra.mxu0 %v594
      %626 = vmatpush.msra.mxu0 %v593
      %627 = vmatpush.msra.mxu0 %v592
      %628 = vmatpush.msra.mxu0 %v591
      %629 = vmatpush.msra.mxu0 %v590
      %630 = vmatpush.msra.mxu0 %v589
      %631 = vmatpush.msra.mxu0 %v588
      %632 = vmatpush.msra.mxu0 %v587
      %633 = vmatpush.msra.mxu0 %v586
      %634 = vmatpush.msra.mxu0 %v585
      %635 = vmatmul.f32.gmra.mxu0 %v577
      %v636 = vpop.f32.mrf.mxu0
      %v637 = vadd.f32 %v618, %v636
      %638 = vmatmul.f32.gmra.mxu0 %v579
      %v639 = vpop.f32.mrf.mxu0
      %v640 = vadd.f32 %v618, %v639
      %641 = vmatmul.f32.gmra.mxu0 %v581
      %v642 = vpop.f32.mrf.mxu0
      %v643 = vadd.f32 %v618, %v642
      %644 = vmatmul.f32.gmra.mxu0 %v583
      %v645 = vpop.f32.mrf.mxu0
      %v646 = vadd.f32 %v618, %v645
      %647 = vdwg.mxu0
      %648 = vmatpush.msra.mxu0 %v616
      %649 = vmatpush.msra.mxu0 %v615
      %650 = vmatpush.msra.mxu0 %v614
      %651 = vmatpush.msra.mxu0 %v613
      %652 = vmatpush.msra.mxu0 %v612
      %653 = vmatpush.msra.mxu0 %v611
      %654 = vmatpush.msra.mxu0 %v610
      %655 = vmatpush.msra.mxu0 %v609
      %656 = vmatpush.msra.mxu0 %v608
      %657 = vmatpush.msra.mxu0 %v607
      %658 = vmatpush.msra.mxu0 %v606
      %659 = vmatpush.msra.mxu0 %v605
      %660 = vmatpush.msra.mxu0 %v604
      %661 = vmatpush.msra.mxu0 %v603
      %662 = vmatpush.msra.mxu0 %v602
      %663 = vmatpush.msra.mxu0 %v601
      %664 = vmatmul.f32.gmra.mxu0 %v578
      %v665 = vpop.f32.mrf.mxu0
      %v666 = vadd.f32 %v637, %v665
      %667 = vmatmul.f32.gmra.mxu0 %v580
      %v668 = vpop.f32.mrf.mxu0
      %v669 = vadd.f32 %v640, %v668
      %670 = vmatmul.f32.gmra.mxu0 %v582
      %v671 = vpop.f32.mrf.mxu0
      %v672 = vadd.f32 %v643, %v671
      %673 = vmatmul.f32.gmra.mxu0 %v584
      %v674 = vpop.f32.mrf.mxu0
      %v675 = vadd.f32 %v646, %v674
      %676 = vdwg.mxu0
      %vm677 = vcmask 64512
      %678 = vst.msk [vmem:[%s281] sm:$0xff] %vm677, %v666
      %679 = vst.msk [vmem:[%s281 + $0x8] sm:$0xff] %vm677, %v669
      %680 = vst.msk [vmem:[%s281 + $0x10] sm:$0xff] %vm677, %v672
      %681 = vst.msk [vmem:[%s281 + $0x18] sm:$0xff] %vm677, %v675
      %s682 = smul.u32 4, %s19
      %p683 = scmp.lt.s32.totalorder %s682, 15
      %s684 = scalar_select %p683, %s682, 15
      %s685 = smul.addr %s684, 8
      %s686 = scalar_lea.vmem %s7, %s685
      // Predicated region
      $region49: #{value_network_forward.1} parent=47 // pred_check
        %p687 = pneg %p189
      $region50: #{value_network_forward.1} parent=47 // pred_check_branch
        %689 = sbr.rel (%p687) target = $region52
      $region51: #{value_network_forward.1} parent=47 // pred_region
        %s690 = smul.u32 4, %s19
      $region52: #{value_network_forward.1} parent=47 // pred_fallthru
        _
    $region48: #{value_network_forward.1} parent=5 // pred_fallthru
      _
    %p691 = scmp.le.s32.totalorder 2, %s14
    // Predicated region
    $region53: #{value_network_forward.1} parent=5 // pred_check
      %p692 = pneg %p691
    $region54: #{value_network_forward.1} parent=5 // pred_check_branch
      %694 = sbr.rel (%p692) target = $region56
    $region55: #{value_network_forward.1} parent=5 // pred_region
      %s695 = ssub.s32 %s14, 2
      // Predicated region
      $region57: #{value_network_forward.1} parent=55 // pred_check
        %p696 = pneg %p195
      $region58: #{value_network_forward.1} parent=55 // pred_check_branch
        %698 = sbr.rel (%p696) target = $region60
      $region59: #{value_network_forward.1} parent=55 // pred_region
        %s699 = smul.u32 4, %s20
        %p700 = scmp.lt.s32.totalorder %s699, 15
        %s701 = scalar_select %p700, %s699, 15
        %s702 = smul.addr %s701, 8
        %s703 = scalar_lea.vmem %s7, %s702
      $region60: #{value_network_forward.1} parent=55 // pred_fallthru
        _
    $region56: #{value_network_forward.1} parent=5 // pred_fallthru
      _
  $region6: #{value_network_forward.1} parent=0 // loop_footer
    %s18 = sadd.s32 1, %s14
  $region7: #{value_network_forward.1} parent=0 // loop_footer_branch
    %13 = sbr.rel target = $region3
  $region8: #{value_network_forward.1} parent=0 // loop_exit
    _

</llo_original>
